<compile_context>
chip_gen: v7x
topology: tpu7x:2x2x1
jax: 0.10.0
libtpu: 0.0.40
codegen_flags: <defaults>
</compile_context>

<pallas_src>
import functools

import jax
import jax.numpy as jnp
from jax.experimental import pallas as pl
from jax.experimental.pallas import tpu as pltpu


def _sublane_align(dtype):
    """Minimum sublane tile for a dtype (f32:8, bf16/f16:16, int8/bool:32)."""
    return {4: 8, 2: 16, 1: 32}.get(jnp.dtype(dtype).itemsize, 8)


def _vmem_capacity_bytes():
    try:
        return int(pltpu.get_tpu_info().vmem_capacity_bytes)
    except Exception:
        return 64 << 20  # conservative default (v7x-sized) if the query fails


def _vmem_budget():
    """Returns (per-step streamed-byte target for BOTH inputs, vmem_limit_bytes)."""
    if _vmem_capacity_bytes() >= (96 << 20):   # v5e / v6e: 128 MiB physical VMEM
        return 8 << 20, 96 << 20               # ~4 MiB per input block
    return 4 << 20, 48 << 20                   # v7x: 64 MiB physical per TC


# --------------------------------------------------------------------------
# Main path: D % 128 == 0.  Inputs viewed (free reshape) as (N, R, 128).
# Grid = (chunks ["parallel"], steps ["arbitrary"]).
# --------------------------------------------------------------------------
def _dice_rows_kernel(logits_ref, targets_ref, out_i_ref, out_pt_ref,
                      acc_i_ref, acc_pt_ref, *, num_rows, any_mask):
    """logits_ref/targets_ref: (N, TR, 128) native-dtype tiles.
    out_i_ref/out_pt_ref:      (N, 8, 128) per-chunk partial sums (f32).
    acc_i_ref/acc_pt_ref:      (N, 8, 128) f32 accumulators (scratch)."""
    c = pl.program_id(0)
    k = pl.program_id(1)
    steps = pl.num_programs(1)
    n, tr, _ = logits_ref.shape

    @pl.when(k == 0)
    def _():
        acc_i_ref[...] = jnp.zeros_like(acc_i_ref)
        acc_pt_ref[...] = jnp.zeros_like(acc_pt_ref)

    # TODO(synk): if a bundle dump ever shows EUP as the binding slot (v7x +
    # bf16 inputs), switch sigmoid to 0.5*(tanh(0.5*x)+1); HBM dominates today.
    probs = jax.nn.sigmoid(logits_ref[...].astype(jnp.float32))
    tgt = targets_ref[...].astype(jnp.float32)

    def accumulate(p, t):
        # Collapse TR with pure elementwise vreg adds (no XLU): the reshape
        # (N,TR,128) -> (N,TR//8,8,128) preserves the (8,128) tiling.
        inter = (p * t).reshape(n, tr // 8, 8, 128)
        both = (p + t).reshape(n, tr // 8, 8, 128)
        acc_i_ref[...] += jnp.sum(inter, axis=1)
        acc_pt_ref[...] += jnp.sum(both, axis=1)

    if any_mask:
        row0 = (c * steps + k) * tr
        overruns = row0 + tr > num_rows

        @pl.when(jnp.logical_not(overruns))
        def _():
            accumulate(probs, tgt)

        @pl.when(overruns)
        def _():
            # Only whole 128-lane rows can be invalid here (D % 128 == 0).
            # Mask both operands before the product (garbage/NaN safe).
            row = jax.lax.broadcasted_iota(jnp.int32, probs.shape, 1)
            valid = (row0 + row) < num_rows
            accumulate(jnp.where(valid, probs, 0.0), jnp.where(valid, tgt, 0.0))
    else:
        accumulate(probs, tgt)

    @pl.when(k == steps - 1)
    def _():
        out_i_ref[...] = acc_i_ref[...]
        out_pt_ref[...] = acc_pt_ref[...]


def _dice_partial_sums_rows(logits2d, targets2d, tile_rows, num_chunks):
    n, d = logits2d.shape
    r = d // 128
    logits3d = logits2d.reshape(n, r, 128)      # free for contiguous arrays
    targets3d = targets2d.reshape(n, r, 128)

    align = max(_sublane_align(logits2d.dtype), _sublane_align(targets2d.dtype))
    itemsize = (jnp.dtype(logits2d.dtype).itemsize
                + jnp.dtype(targets2d.dtype).itemsize)
    step_bytes_target, vmem_limit = _vmem_budget()

    bytes_per_row = n * 128 * itemsize
    if tile_rows is None:
        tr = min(r, max(align, step_bytes_target // bytes_per_row))
        # Keep >= ~4 pipeline steps so DMA and compute overlap.
        if r // max(tr, 1) < 4 and r >= 4 * align:
            tr = r // 4
    else:
        tr = min(int(tile_rows), r)
    tr = max(align, (tr // align) * align)

    steps_total = pl.cdiv(r, tr)
    if num_chunks is None:
        num_chunks = 2 if steps_total >= 8 else 1
    num_chunks = max(1, min(int(num_chunks), steps_total))
    steps_per_chunk = pl.cdiv(steps_total, num_chunks)
    # Trailing logical blocks of the last chunk may lie past R; their block
    # index is clamped (DMA stays in bounds) and their contribution is masked.
    any_mask = num_chunks * steps_per_chunk * tr > r
    last_block = steps_total - 1

    def in_index(c, k):
        return (0, jnp.minimum(c * steps_per_chunk + k, last_block), 0)

    kernel = functools.partial(_dice_rows_kernel, num_rows=r, any_mask=any_mask)
    out_i, out_pt = pl.pallas_call(
        kernel,
        out_shape=(
            jax.ShapeDtypeStruct((num_chunks, n, 8, 128), jnp.float32),
            jax.ShapeDtypeStruct((num_chunks, n, 8, 128), jnp.float32),
        ),
        grid_spec=pltpu.PrefetchScalarGridSpec(
            num_scalar_prefetch=0,
            grid=(num_chunks, steps_per_chunk),
            in_specs=[
                pl.BlockSpec((n, tr, 128), in_index),
                pl.BlockSpec((n, tr, 128), in_index),
            ],
            out_specs=(
                pl.BlockSpec((None, n, 8, 128), lambda c, k: (c, 0, 0, 0)),
                pl.BlockSpec((None, n, 8, 128), lambda c, k: (c, 0, 0, 0)),
            ),
            scratch_shapes=[
                pltpu.VMEM((n, 8, 128), jnp.float32),   # sum(probs * targets)
                pltpu.VMEM((n, 8, 128), jnp.float32),   # sum(probs + targets)
            ],
        ),
        compiler_params=pltpu.CompilerParams(
            dimension_semantics=("parallel", "arbitrary"),
            vmem_limit_bytes=vmem_limit),
    )(logits3d, targets3d)

    return jnp.sum(out_i, axis=(0, 2, 3)), jnp.sum(out_pt, axis=(0, 2, 3))


# --------------------------------------------------------------------------
# Fallback path: D % 128 != 0.  Streams the unpadded (N, D) arrays directly
# (no jnp.pad / extra HBM pass); the tail of the last block is masked in-kernel.
# --------------------------------------------------------------------------
def _dice_flat_kernel(logits_ref, targets_ref, out_i_ref, out_pt_ref,
                      acc_i_ref, acc_pt_ref, *, d_total):
    k = pl.program_id(0)
    n, tc = logits_ref.shape

    @pl.when(k == 0)
    def _():
        acc_i_ref[...] = jnp.zeros_like(acc_i_ref)
        acc_pt_ref[...] = jnp.zeros_like(acc_pt_ref)

    probs = jax.nn.sigmoid(logits_ref[...].astype(jnp.float32))
    tgt = targets_ref[...].astype(jnp.float32)
    col0 = k * tc

    def accumulate(p, t):
        inter = p * t
        both = p + t
        acc_i = acc_i_ref[...]
        acc_pt = acc_pt_ref[...]
        # Static, 128-aligned lane slices: pure elementwise vreg adds.
        for cc in range(tc // 128):
            sl = slice(cc * 128, (cc + 1) * 128)
            acc_i = acc_i + inter[:, sl]
            acc_pt = acc_pt + both[:, sl]
        acc_i_ref[...] = acc_i
        acc_pt_ref[...] = acc_pt

    overruns = col0 + tc > d_total

    @pl.when(jnp.logical_not(overruns))
    def _():
        accumulate(probs, tgt)

    @pl.when(overruns)
    def _():
        col = jax.lax.broadcasted_iota(jnp.int32, probs.shape, 1)
        valid = (col0 + col) < d_total
        accumulate(jnp.where(valid, probs, 0.0), jnp.where(valid, tgt, 0.0))

    @pl.when(k == pl.num_programs(0) - 1)
    def _():
        out_i_ref[...] = acc_i_ref[...]
        out_pt_ref[...] = acc_pt_ref[...]


def _dice_partial_sums_flat(logits2d, targets2d):
    n, d = logits2d.shape
    itemsize = (jnp.dtype(logits2d.dtype).itemsize
                + jnp.dtype(targets2d.dtype).itemsize)
    step_bytes_target, vmem_limit = _vmem_budget()

    d_pad = pl.cdiv(d, 128) * 128
    tc = step_bytes_target // (n * itemsize)
    # Cap at 128 lane-tiles to bound the unrolled in-kernel chunk adds.
    tc = max(128, (min(tc, d_pad, 128 * 128) // 128) * 128)
    steps = pl.cdiv(d, tc)

    kernel = functools.partial(_dice_flat_kernel, d_total=d)
    out_i, out_pt = pl.pallas_call(
        kernel,
        out_shape=(
            jax.ShapeDtypeStruct((n, 128), jnp.float32),
            jax.ShapeDtypeStruct((n, 128), jnp.float32),
        ),
        grid_spec=pltpu.PrefetchScalarGridSpec(
            num_scalar_prefetch=0,
            grid=(steps,),
            in_specs=[
                pl.BlockSpec((n, tc), lambda k: (0, k)),
                pl.BlockSpec((n, tc), lambda k: (0, k)),
            ],
            out_specs=(
                pl.BlockSpec((n, 128), lambda k: (0, 0)),
                pl.BlockSpec((n, 128), lambda k: (0, 0)),
            ),
            scratch_shapes=[
                pltpu.VMEM((n, 128), jnp.float32),
                pltpu.VMEM((n, 128), jnp.float32),
            ],
        ),
        compiler_params=pltpu.CompilerParams(
            dimension_semantics=("arbitrary",),
            vmem_limit_bytes=vmem_limit),
    )(logits2d, targets2d)

    return jnp.sum(out_i, axis=1), jnp.sum(out_pt, axis=1)


# --------------------------------------------------------------------------
# Public wrapper (== SoftDiceLoss.forward).
# --------------------------------------------------------------------------
@functools.partial(jax.jit, static_argnames=("tile_rows", "num_chunks"))
def soft_dice_loss(logits, targets, tile_rows=None, num_chunks=None):
    """logits/targets: (N, ...) arrays (e.g. NCHW).  Returns a scalar f32 loss."""
    n = logits.shape[0]
    logits2d = logits.reshape(n, -1)
    targets2d = targets.reshape(n, -1)
    if targets2d.shape != logits2d.shape:
        raise ValueError("logits and targets must have the same per-sample size")
    d = logits2d.shape[1]

    if d % 128 == 0:
        inter, both = _dice_partial_sums_rows(logits2d, targets2d,
                                              tile_rows, num_chunks)
    else:
        inter, both = _dice_partial_sums_flat(logits2d, targets2d)

    score = 2.0 * (inter + 1.0) / (both + 1.0)
    return (1.0 - jnp.sum(score) / jnp.float32(n)).astype(jnp.float32)


def soft_dice_loss_ref(logits, targets):
    n = logits.shape[0]
    probs = jax.nn.sigmoid(logits.astype(jnp.float32))
    m1 = probs.reshape(n, -1)
    m2 = targets.reshape(n, -1).astype(jnp.float32)
    inter = jnp.sum(m1 * m2, axis=1)
    score = 2.0 * (inter + 1.0) / (jnp.sum(m1, axis=1) + jnp.sum(m2, axis=1) + 1.0)
    return 1.0 - jnp.sum(score) / n


if __name__ == "__main__":
    key = jax.random.PRNGKey(0)
    k1, k2, k3, k4, k5, k6 = jax.random.split(key, 6)

    def check(name, loss, ref):
        loss = jax.block_until_ready(loss)
        assert jnp.allclose(loss, ref, atol=1e-5, rtol=1e-5), (name, loss, ref)

    # 1) Main path: N=2, C=4, H=W=16 -> D=1024 (multiple of 128).
    logits = jax.random.normal(k1, (2, 4, 16, 16), dtype=jnp.float32)
    targets = (jax.random.uniform(k2, (2, 4, 16, 16)) > 0.5).astype(jnp.float32)
    check("base", soft_dice_loss(logits, targets),
          soft_dice_loss_ref(logits, targets))

    # 2) Multi-step grid, 2 parallel chunks, clamped + masked trailing block.
    logits_b = jax.random.normal(k3, (2, 4, 24, 24), dtype=jnp.float32)
    targets_b = (jax.random.uniform(k4, (2, 4, 24, 24)) > 0.5).astype(jnp.float32)
    check("chunked",
          soft_dice_loss(logits_b, targets_b, tile_rows=8, num_chunks=2),
          soft_dice_loss_ref(logits_b, targets_b))

    # 3) Ragged D (not a multiple of 128): pad-free 2D streaming fallback.
    logits_c = jax.random.normal(k5, (2, 3, 7, 7), dtype=jnp.float32)
    targets_c = (jax.random.uniform(k6, (2, 3, 7, 7)) > 0.5).astype(jnp.float32)
    check("ragged", soft_dice_loss(logits_c, targets_c),
          soft_dice_loss_ref(logits_c, targets_c))

    # 4) Mixed dtypes: bf16 logits stream natively; sublane align becomes 16.
    logits_d = logits.astype(jnp.bfloat16)
    check("bf16", soft_dice_loss(logits_d, targets),
          soft_dice_loss_ref(logits_d, targets))

    print("KERNEL_OK")
</pallas_src>

<mosaic_0001>
module attributes {stable_mosaic.version = 11 : i64} {
  func.func @_dice_rows_kernel(%arg0: i32, %arg1: i32, %arg2: memref<2x8x128xf32, #tpu.memory_space<vmem>>, %arg3: memref<2x8x128xf32, #tpu.memory_space<vmem>>, %arg4: memref<1x2x8x128xf32, #tpu.memory_space<vmem>>, %arg5: memref<1x2x8x128xf32, #tpu.memory_space<vmem>>, %arg6: memref<2x8x128xf32, #tpu.memory_space<vmem>>, %arg7: memref<2x8x128xf32, #tpu.memory_space<vmem>>) attributes {dimension_semantics = [#tpu.dimension_semantics<parallel>, #tpu.dimension_semantics<arbitrary>], iteration_bounds = array<i64: 1, 1>, scalar_prefetch = 0 : i64, scratch_operands = 2 : i64, tpu.core_type = #tpu.core_type<tc>, window_params = [{transform_indices = @transform_0, window_bounds = array<i64: 2, 8, 128>}, {transform_indices = @transform_1, window_bounds = array<i64: 2, 8, 128>}, {transform_indices = @transform_2, window_bounds = array<i64: 1, 2, 8, 128>}, {transform_indices = @transform_3, window_bounds = array<i64: 1, 2, 8, 128>}]} {
    %c0_i32 = arith.constant 0 : i32
    %0 = arith.cmpi eq, %arg1, %c0_i32 : i32
    %1 = arith.extui %0 : i1 to i32
    %c0_i32_0 = arith.constant 0 : i32
    %2 = arith.cmpi ne, %1, %c0_i32_0 : i32
    scf.if %2 {
      %cst_22 = arith.constant 0.000000e+00 : f32
      %25 = vector.broadcast %cst_22 : f32 to vector<2x8x128xf32>
      %c0_23 = arith.constant 0 : index
      %c0_24 = arith.constant 0 : index
      %c0_25 = arith.constant 0 : index
      %26 = vector.load %arg6[%c0_23, %c0_24, %c0_25] : memref<2x8x128xf32, #tpu.memory_space<vmem>>, vector<2x8x128xf32>
      tpu.vector_store %arg6[%c0_23, %c0_24, %c0_25], %25 {strides = array<i32>} : memref<2x8x128xf32, #tpu.memory_space<vmem>>, vector<2x8x128xf32>,
      %cst_26 = arith.constant 0.000000e+00 : f32
      %27 = vector.broadcast %cst_26 : f32 to vector<2x8x128xf32>
      %c0_27 = arith.constant 0 : index
      %c0_28 = arith.constant 0 : index
      %c0_29 = arith.constant 0 : index
      %28 = vector.load %arg7[%c0_27, %c0_28, %c0_29] : memref<2x8x128xf32, #tpu.memory_space<vmem>>, vector<2x8x128xf32>
      tpu.vector_store %arg7[%c0_27, %c0_28, %c0_29], %27 {strides = array<i32>} : memref<2x8x128xf32, #tpu.memory_space<vmem>>, vector<2x8x128xf32>,
    } else {
    }
    %c0 = arith.constant 0 : index
    %c0_1 = arith.constant 0 : index
    %c0_2 = arith.constant 0 : index
    %3 = vector.load %arg2[%c0, %c0_1, %c0_2] : memref<2x8x128xf32, #tpu.memory_space<vmem>>, vector<2x8x128xf32>
    %4 = arith.negf %3 : vector<2x8x128xf32>
    %5 = math.exp %4 : vector<2x8x128xf32>
    %cst = arith.constant 1.000000e+00 : f32
    %6 = vector.broadcast %cst : f32 to vector<2x8x128xf32>
    %7 = arith.addf %6, %5 : vector<2x8x128xf32>
    %8 = arith.divf %6, %7 : vector<2x8x128xf32>
    %c0_3 = arith.constant 0 : index
    %c0_4 = arith.constant 0 : index
    %c0_5 = arith.constant 0 : index
    %9 = vector.load %arg3[%c0_3, %c0_4, %c0_5] : memref<2x8x128xf32, #tpu.memory_space<vmem>>, vector<2x8x128xf32>
    %10 = arith.mulf %8, %9 : vector<2x8x128xf32>
    %11 = vector.shape_cast %10 : vector<2x8x128xf32> to vector<2x1x8x128xf32>
    %12 = arith.addf %8, %9 : vector<2x8x128xf32>
    %13 = vector.shape_cast %12 : vector<2x8x128xf32> to vector<2x1x8x128xf32>
    %c0_6 = arith.constant 0 : index
    %c0_7 = arith.constant 0 : index
    %c0_8 = arith.constant 0 : index
    %14 = vector.load %arg6[%c0_6, %c0_7, %c0_8] : memref<2x8x128xf32, #tpu.memory_space<vmem>>, vector<2x8x128xf32>
    %cst_9 = arith.constant dense<0.000000e+00> : vector<2x8x128xf32>
    %15 = vector.multi_reduction <add>, %11, %cst_9 [1] : vector<2x1x8x128xf32> to vector<2x8x128xf32>
    %16 = arith.addf %14, %15 : vector<2x8x128xf32>
    %c0_10 = arith.constant 0 : index
    %c0_11 = arith.constant 0 : index
    %c0_12 = arith.constant 0 : index
    %17 = vector.load %arg6[%c0_10, %c0_11, %c0_12] : memref<2x8x128xf32, #tpu.memory_space<vmem>>, vector<2x8x128xf32>
    tpu.vector_store %arg6[%c0_10, %c0_11, %c0_12], %16 {strides = array<i32>} : memref<2x8x128xf32, #tpu.memory_space<vmem>>, vector<2x8x128xf32>,
    %c0_13 = arith.constant 0 : index
    %c0_14 = arith.constant 0 : index
    %c0_15 = arith.constant 0 : index
    %18 = vector.load %arg7[%c0_13, %c0_14, %c0_15] : memref<2x8x128xf32, #tpu.memory_space<vmem>>, vector<2x8x128xf32>
    %cst_16 = arith.constant dense<0.000000e+00> : vector<2x8x128xf32>
    %19 = vector.multi_reduction <add>, %13, %cst_16 [1] : vector<2x1x8x128xf32> to vector<2x8x128xf32>
    %20 = arith.addf %18, %19 : vector<2x8x128xf32>
    %c0_17 = arith.constant 0 : index
    %c0_18 = arith.constant 0 : index
    %c0_19 = arith.constant 0 : index
    %21 = vector.load %arg7[%c0_17, %c0_18, %c0_19] : memref<2x8x128xf32, #tpu.memory_space<vmem>>, vector<2x8x128xf32>
    tpu.vector_store %arg7[%c0_17, %c0_18, %c0_19], %20 {strides = array<i32>} : memref<2x8x128xf32, #tpu.memory_space<vmem>>, vector<2x8x128xf32>,
    %c0_i32_20 = arith.constant 0 : i32
    %22 = arith.cmpi eq, %arg1, %c0_i32_20 : i32
    %23 = arith.extui %22 : i1 to i32
    %c0_i32_21 = arith.constant 0 : i32
    %24 = arith.cmpi ne, %23, %c0_i32_21 : i32
    scf.if %24 {
      %c0_22 = arith.constant 0 : index
      %c0_23 = arith.constant 0 : index
      %c0_24 = arith.constant 0 : index
      %25 = vector.load %arg6[%c0_22, %c0_23, %c0_24] : memref<2x8x128xf32, #tpu.memory_space<vmem>>, vector<2x8x128xf32>
      %c0_25 = arith.constant 0 : index
      %c0_26 = arith.constant 0 : index
      %c0_27 = arith.constant 0 : index
      %c0_28 = arith.constant 0 : index
      %26 = vector.load %arg4[%c0_25, %c0_26, %c0_27, %c0_28] : memref<1x2x8x128xf32, #tpu.memory_space<vmem>>, vector<1x2x8x128xf32>
      %27 = vector.shape_cast %26 : vector<1x2x8x128xf32> to vector<2x8x128xf32>
      %28 = vector.shape_cast %25 : vector<2x8x128xf32> to vector<1x2x8x128xf32>
      tpu.vector_store %arg4[%c0_25, %c0_26, %c0_27, %c0_28], %28 {strides = array<i32>} : memref<1x2x8x128xf32, #tpu.memory_space<vmem>>, vector<1x2x8x128xf32>,
      %c0_29 = arith.constant 0 : index
      %c0_30 = arith.constant 0 : index
      %c0_31 = arith.constant 0 : index
      %29 = vector.load %arg7[%c0_29, %c0_30, %c0_31] : memref<2x8x128xf32, #tpu.memory_space<vmem>>, vector<2x8x128xf32>
      %c0_32 = arith.constant 0 : index
      %c0_33 = arith.constant 0 : index
      %c0_34 = arith.constant 0 : index
      %c0_35 = arith.constant 0 : index
      %30 = vector.load %arg5[%c0_32, %c0_33, %c0_34, %c0_35] : memref<1x2x8x128xf32, #tpu.memory_space<vmem>>, vector<1x2x8x128xf32>
      %31 = vector.shape_cast %30 : vector<1x2x8x128xf32> to vector<2x8x128xf32>
      %32 = vector.shape_cast %29 : vector<2x8x128xf32> to vector<1x2x8x128xf32>
      tpu.vector_store %arg5[%c0_32, %c0_33, %c0_34, %c0_35], %32 {strides = array<i32>} : memref<1x2x8x128xf32, #tpu.memory_space<vmem>>, vector<1x2x8x128xf32>,
    } else {
    }
    return
  }
  func.func @transform_0(%arg0: i32, %arg1: i32) -> (i32, i32, i32) {
    %c1_i32 = arith.constant 1 : i32
    %0 = arith.muli %arg0, %c1_i32 : i32
    %1 = arith.addi %0, %arg1 : i32
    %c0_i32 = arith.constant 0 : i32
    %2 = arith.minsi %1, %c0_i32 : i32
    %c0_i32_0 = arith.constant 0 : i32
    %c0_i32_1 = arith.constant 0 : i32
    %c0_i32_2 = arith.constant 0 : i32
    return %c0_i32_0, %2, %c0_i32_1 : i32, i32, i32
  }
  func.func @transform_1(%arg0: i32, %arg1: i32) -> (i32, i32, i32) {
    %c1_i32 = arith.constant 1 : i32
    %0 = arith.muli %arg0, %c1_i32 : i32
    %1 = arith.addi %0, %arg1 : i32
    %c0_i32 = arith.constant 0 : i32
    %2 = arith.minsi %1, %c0_i32 : i32
    %c0_i32_0 = arith.constant 0 : i32
    %c0_i32_1 = arith.constant 0 : i32
    %c0_i32_2 = arith.constant 0 : i32
    return %c0_i32_0, %2, %c0_i32_1 : i32, i32, i32
  }
  func.func @transform_2(%arg0: i32, %arg1: i32) -> (i32, i32, i32, i32) {
    %c0_i32 = arith.constant 0 : i32
    %c0_i32_0 = arith.constant 0 : i32
    %c0_i32_1 = arith.constant 0 : i32
    %c0_i32_2 = arith.constant 0 : i32
    return %arg0, %c0_i32, %c0_i32_0, %c0_i32_1 : i32, i32, i32, i32
  }
  func.func @transform_3(%arg0: i32, %arg1: i32) -> (i32, i32, i32, i32) {
    %c0_i32 = arith.constant 0 : i32
    %c0_i32_0 = arith.constant 0 : i32
    %c0_i32_1 = arith.constant 0 : i32
    %c0_i32_2 = arith.constant 0 : i32
    return %arg0, %c0_i32, %c0_i32_0, %c0_i32_1 : i32, i32, i32, i32
  }
}

</mosaic_0001>

<llo_original>
// kernel: soft_dice_loss.1
$region0: #{soft_dice_loss.1}
  #allocation0 [shape = 'u32[]', space=smem, size = 0x4, offset = 0x4, fixed_abs, tag = 'smem constant byte address 0x4 - core index']
  #allocation1 [shape = 'u32[144,128]{1,0:T(1,128)}', space=vmem, size = 0x12000, scoped, tag = 'internal scratch']
  #allocation2 [shape = 'f32[2,8,128]{2,1,0:T(8,128)}', space=vmem, size = 0x2000, scoped, tag = 'scratch operand']
  #allocation3 [shape = 'f32[2,8,128]{2,1,0:T(8,128)}', space=vmem, size = 0x2000, scoped, tag = 'scratch operand']
  %s0 = inlined_call_operand.vmem [shape: f32[2,8,128], index: 0, kind: input, shape index: {}]
  %s1 = inlined_call_operand.vmem [shape: f32[2,8,128], index: 1, kind: input, shape index: {}]
  %s2 = inlined_call_operand.vmem [shape: f32[1,2,8,128], index: 2, kind: output, shape index: {0}]
  %s3 = inlined_call_operand.vmem [shape: f32[1,2,8,128], index: 3, kind: output, shape index: {1}]
  %4 = xla_tuple %s2, %s3
  %s5 = sld [smem:[#allocation0]]
  $region34: #{soft_dice_loss.1} parent=0
    _
  %s7 = ssub.s32 1, %s5
  %s8 = scalar_select 0, %s7, %s5
  // Predicated region
  $region2: #{soft_dice_loss.1} parent=0 // pred_check
    _
  $region3: #{soft_dice_loss.1} parent=0 // pred_check_branch
    %10 = sbr.rel (0) target = $region5
  $region4: #{soft_dice_loss.1} parent=0 // pred_region
    %s11 = sadd.s32 0, 0
    %p12 = scmp.lt.s32.totalorder %s11, 0
    %s13 = scalar_select %p12, %s11, 0
    %p14 = scmp.lt.s32.totalorder %s13, 0
    %s15 = scalar_select %p14, %s13, 0
    %s16 = smul.addr %s15, 8
    %s17 = scalar_lea.vmem %s0, %s16
    %s18 = sadd.s32 0, 0
    %p19 = scmp.lt.s32.totalorder %s18, 0
    %s20 = scalar_select %p19, %s18, 0
  $region5: #{soft_dice_loss.1} parent=0 // pred_fallthru
    _
  // Predicated region
  $region6: #{soft_dice_loss.1} parent=0 // pred_check
    _
  $region7: #{soft_dice_loss.1} parent=0 // pred_check_branch
    %22 = sbr.rel (0) target = $region9
  $region8: #{soft_dice_loss.1} parent=0 // pred_region
    %s23 = sadd.s32 0, 0
    %p24 = scmp.lt.s32.totalorder %s23, 0
    %s25 = scalar_select %p24, %s23, 0
    %p26 = scmp.lt.s32.totalorder %s25, 0
    %s27 = scalar_select %p26, %s25, 0
    %s28 = smul.addr %s27, 8
    %s29 = scalar_lea.vmem %s1, %s28
    %s30 = sadd.s32 0, 0
    %p31 = scmp.lt.s32.totalorder %s30, 0
    %s32 = scalar_select %p31, %s30, 0
  $region9: #{soft_dice_loss.1} parent=0 // pred_fallthru
    _
  %s33 = sadd.s32 0, 0
  %p34 = scmp.lt.s32.totalorder %s33, 0
  %s35 = scalar_select %p34, %s33, 0
  %p36 = scmp.lt.s32.totalorder %s35, 0
  %s37 = scalar_select %p36, %s35, 0
  %s38 = smul.addr %s37, 8
  %s39 = scalar_lea.vmem %s0, %s38
  %s40 = sadd.s32 0, 0
  %p41 = scmp.lt.s32.totalorder %s40, 0
  %s42 = scalar_select %p41, %s40, 0
  %p43 = scmp.lt.s32.totalorder %s42, 0
  %s44 = scalar_select %p43, %s42, 0
  %s45 = smul.addr %s44, 8
  %s46 = scalar_lea.vmem %s1, %s45
  %s47 = sadd.s32 0, 0
  %p48 = scmp.lt.s32.totalorder %s47, 0
  %s49 = scalar_select %p48, %s47, 0
  %p50 = scmp.lt.s32.totalorder %s49, 0
  %s51 = scalar_select %p50, %s49, 0
  %s52 = smul.addr %s51, 8
  %s53 = scalar_lea.vmem %s0, %s52
  %s54 = sadd.s32 0, 0
  %p55 = scmp.lt.s32.totalorder %s54, 0
  %s56 = scalar_select %p55, %s54, 0
  %s57 = sadd.s32 0, 0
  %p58 = scmp.lt.s32.totalorder %s57, 0
  %s59 = scalar_select %p58, %s57, 0
  %p60 = scmp.lt.s32.totalorder %s59, 0
  %s61 = scalar_select %p60, %s59, 0
  %s62 = smul.addr %s61, 8
  %s63 = scalar_lea.vmem %s1, %s62
  %s64 = sadd.s32 0, 0
  %p65 = scmp.lt.s32.totalorder %s64, 0
  %s66 = scalar_select %p65, %s64, 0
  %p67 = scmp.eq.s32.totalorder 0, 0
  // Predicated region
  $region10: #{soft_dice_loss.1} parent=0 // pred_check
    %p68 = pneg %p67
  $region11: #{soft_dice_loss.1} parent=0 // pred_check_branch
    %70 = sbr.rel (%p68) target = $region13
  $region12: #{soft_dice_loss.1} parent=0 // pred_region
    %71 = vst [vmem:[#allocation2] sm:$0xff] 0.0
    %72 = vst [vmem:[#allocation2 + $0x8] sm:$0xff] 0.0
    %73 = vst [vmem:[#allocation3] sm:$0xff] 0.0
    %74 = vst [vmem:[#allocation3 + $0x8] sm:$0xff] 0.0
  $region13: #{soft_dice_loss.1} parent=0 // pred_fallthru
    _
  %v75 = vld [vmem:[%s53] sm:$0xff]
  %v76 = vld [vmem:[%s53 + $0x8] sm:$0xff]
  %v77 = vxor.u32 %v75, 2147483648
  %v78 = vxor.u32 %v76, 2147483648
  %v79 = vmul.f32 %v77, 1.442695
  %v80 = vpow.pop %v79
  %v81 = vmul.f32 %v78, 1.442695
  %v82 = vpow.pop %v81
  %v83 = vadd.f32 %v80, 1.0
  %v84 = vadd.f32 %v82, 1.0
  %v85 = vrcp.pop %v83
  %v86 = vmul.f32 1.0, %v85
  %v87 = vrcp.pop %v84
  %v88 = vmul.f32 1.0, %v87
  %v89 = vld [vmem:[%s63] sm:$0xff]
  %v90 = vld [vmem:[%s63 + $0x8] sm:$0xff]
  %v91 = vmul.f32 %v86, %v89
  %v92 = vmul.f32 %v88, %v90
  %v93 = vadd.f32 %v86, %v89
  %v94 = vadd.f32 %v88, %v90
  %v95 = vld [vmem:[#allocation2] sm:$0xff]
  %v96 = vld [vmem:[#allocation2 + $0x8] sm:$0xff]
  %v97 = vadd.f32 %v91, 0.0
  %v98 = vadd.f32 %v92, 0.0
  %v99 = vadd.f32 %v95, %v97
  %v100 = vadd.f32 %v96, %v98
  %101 = vst [vmem:[#allocation2] sm:$0xff] %v99
  %102 = vst [vmem:[#allocation2 + $0x8] sm:$0xff] %v100
  %v103 = vld [vmem:[#allocation3] sm:$0xff]
  %v104 = vld [vmem:[#allocation3 + $0x8] sm:$0xff]
  %v105 = vadd.f32 %v93, 0.0
  %v106 = vadd.f32 %v94, 0.0
  %v107 = vadd.f32 %v103, %v105
  %v108 = vadd.f32 %v104, %v106
  %109 = vst [vmem:[#allocation3] sm:$0xff] %v107
  %110 = vst [vmem:[#allocation3 + $0x8] sm:$0xff] %v108
  // Predicated region
  $region14: #{soft_dice_loss.1} parent=0 // pred_check
    %p111 = pneg %p67
  $region15: #{soft_dice_loss.1} parent=0 // pred_check_branch
    %113 = sbr.rel (%p111) target = $region17
  $region16: #{soft_dice_loss.1} parent=0 // pred_region
    %v114 = vld [vmem:[#allocation2] sm:$0xff]
    %v115 = vld [vmem:[#allocation2 + $0x8] sm:$0xff]
    %116 = vst [vmem:[%s2] sm:$0xff] %v114
    %117 = vst [vmem:[%s2 + $0x8] sm:$0xff] %v115
    %v118 = vld [vmem:[#allocation3] sm:$0xff]
    %v119 = vld [vmem:[#allocation3 + $0x8] sm:$0xff]
    %120 = vst [vmem:[%s3] sm:$0xff] %v118
    %121 = vst [vmem:[%s3 + $0x8] sm:$0xff] %v119
  $region17: #{soft_dice_loss.1} parent=0 // pred_fallthru
    _
  // Predicated region
  $region18: #{soft_dice_loss.1} parent=0 // pred_check
    _
  $region19: #{soft_dice_loss.1} parent=0 // pred_check_branch
    %123 = sbr.rel (0) target = $region21
  $region20: #{soft_dice_loss.1} parent=0 // pred_region
    _
  $region21: #{soft_dice_loss.1} parent=0 // pred_fallthru
    _
  // Predicated region
  $region22: #{soft_dice_loss.1} parent=0 // pred_check
    _
  $region23: #{soft_dice_loss.1} parent=0 // pred_check_branch
    %125 = sbr.rel (0) target = $region25
  $region24: #{soft_dice_loss.1} parent=0 // pred_region
    _
  $region25: #{soft_dice_loss.1} parent=0 // pred_fallthru
    _
  // Predicated region
  $region26: #{soft_dice_loss.1} parent=0 // pred_check
    _
  $region27: #{soft_dice_loss.1} parent=0 // pred_check_branch
    %127 = sbr.rel (0) target = $region29
  $region28: #{soft_dice_loss.1} parent=0 // pred_region
    _
  $region29: #{soft_dice_loss.1} parent=0 // pred_fallthru
    _
  // Predicated region
  $region30: #{soft_dice_loss.1} parent=0 // pred_check
    _
  $region31: #{soft_dice_loss.1} parent=0 // pred_check_branch
    %129 = sbr.rel (0) target = $region33
  $region32: #{soft_dice_loss.1} parent=0 // pred_region
    _
  $region33: #{soft_dice_loss.1} parent=0 // pred_fallthru
    _

</llo_original>
